<compile_context>
chip_gen: v5e
topology: v5e:2x2
jax: 0.10.0
libtpu: 0.0.40
codegen_flags: <defaults>
</compile_context>

<pallas_src>
import jax
import jax.numpy as jnp
from jax.experimental import pallas as pl
from jax.experimental.pallas import tpu as pltpu


def net1_kernel(x_ref, w1_ref, b1_ref, w2_ref, b2_ref, o_ref):
    # hidden = sigmoid(x @ W1 + b1): MXU dot (f32 accumulator), bias add on
    # the VPU (free slack at this regime), sigmoid on the EUP logistic path.
    h = jnp.dot(x_ref[...], w1_ref[...], preferred_element_type=jnp.float32)
    h = jax.nn.sigmoid(h + b1_ref[...])
    # out = h @ W2 + b2: W2/b2 columns are pre-padded to a multiple of 128
    # (zeros), so this store is lane-dense (unmasked vst, no vst.msk).
    # At real sizes: cast the dot operands to bf16 here, keep f32 accumulate.
    o = jnp.dot(h.astype(w2_ref.dtype), w2_ref[...],
                preferred_element_type=jnp.float32)
    o_ref[...] = (o + b2_ref[...]).astype(o_ref.dtype)


def prepare_params(w1, b1, w2, b2):
    """One-time parameter prep (outside the per-call path).

    Zero-pads the output dimension of W2/b2 up to a multiple of 128 so the
    kernel's output store is lane-dense.  Weights are stored (in, out) so the
    kernel computes x @ W, matching nn.Linear's x @ W.T + b semantics.
    """
    n_out = w2.shape[1]
    n_out_pad = max(128, ((n_out + 127) // 128) * 128)
    w2p = jnp.zeros((w2.shape[0], n_out_pad), w2.dtype).at[:, :n_out].set(w2)
    b2p = jnp.zeros((1, n_out_pad), b2.dtype).at[:, :n_out].set(b2.reshape(1, -1))
    return w1, b1.reshape(1, -1), w2p, b2p, n_out


def net1_forward(x, w1, b1, w2p, b2p, n_out, *, block_b=None):
    """x: (B, n_in); w1: (n_in, n_hidden); b1: (1, n_hidden);
    w2p: (n_hidden, n_out_pad); b2p: (1, n_out_pad)."""
    B, n_in = x.shape
    n_hidden = w1.shape[1]
    n_out_pad = w2p.shape[1]

    # Batch tile: whole batch at toy sizes, capped at 512 rows when B grows
    # (>=512-row tiles reach ~85% of HBM roofline; shrink for v7x's 64 MiB).
    if block_b is None:
        block_b = B if B <= 512 else 512
    grid = (pl.cdiv(B, block_b),)

    itemsize = jnp.dtype(x.dtype).itemsize
    tile_bytes = 2 * block_b * (n_in + n_out_pad) * itemsize        # dbl-buffered x/out tiles
    weight_bytes = (n_in * n_hidden + n_hidden
                    + n_hidden * n_out_pad + n_out_pad) * itemsize  # resident params
    vmem_limit = int(min(32 * 1024 * 1024,
                         max(4 * 1024 * 1024, 4 * (tile_bytes + weight_bytes))))

    cost = pl.CostEstimate(
        flops=2 * B * (n_in * n_hidden + n_hidden * n_out_pad),
        transcendentals=B * n_hidden,
        bytes_accessed=(B * n_in + n_in * n_hidden + n_hidden
                        + n_hidden * n_out_pad + n_out_pad
                        + B * n_out_pad) * itemsize,
    )

    out_pad = pl.pallas_call(
        net1_kernel,
        out_shape=jax.ShapeDtypeStruct((B, n_out_pad), x.dtype),
        grid=grid,
        in_specs=[
            pl.BlockSpec((block_b, n_in), lambda i: (i, 0)),        # x: batch-tiled
            pl.BlockSpec((n_in, n_hidden), lambda i: (0, 0)),       # W1: VMEM-resident
            pl.BlockSpec((1, n_hidden), lambda i: (0, 0)),          # b1: VMEM-resident
            pl.BlockSpec((n_hidden, n_out_pad), lambda i: (0, 0)),  # W2 (lane-padded)
            pl.BlockSpec((1, n_out_pad), lambda i: (0, 0)),         # b2 (lane-padded)
        ],
        out_specs=pl.BlockSpec((block_b, n_out_pad), lambda i: (i, 0)),
        compiler_params=pltpu.CompilerParams(
            dimension_semantics=("parallel",),  # batch tiles shard across v7x's 2 TCs
            vmem_limit_bytes=vmem_limit,
        ),
        cost_estimate=cost,
    )(x, w1, b1, w2p, b2p)

    # Strip the lane padding (tiny slice; the kernel store itself is unmasked).
    return out_pad[:, :n_out]


if __name__ == "__main__":
    # Small shapes consistent with the module: batch=8, n_input=16,
    # n_hidden=32, n_output=8.
    B, n_input, n_hidden, n_output = 8, 16, 32, 8
    key = jax.random.PRNGKey(0)
    kx, k1, kb1, k2, kb2 = jax.random.split(key, 5)

    x = jax.random.normal(kx, (B, n_input), dtype=jnp.float32)

    # Deterministic parameter init (PyTorch-like uniform bounds), stored as
    # (in, out) so the kernel does x @ W.
    bound1 = 1.0 / (n_input ** 0.5)
    w1 = jax.random.uniform(k1, (n_input, n_hidden), jnp.float32, -bound1, bound1)
    b1 = jax.random.uniform(kb1, (1, n_hidden), jnp.float32, -bound1, bound1)
    bound2 = 1.0 / (n_hidden ** 0.5)
    w2 = jax.random.uniform(k2, (n_hidden, n_output), jnp.float32, -bound2, bound2)
    b2 = jax.random.uniform(kb2, (1, n_output), jnp.float32, -bound2, bound2)

    # One-time param prep (lane-padding of the output projection).
    w1p, b1p, w2p, b2p, n_out = prepare_params(w1, b1, w2, b2)

    out = net1_forward(x, w1p, b1p, w2p, b2p, n_out)
    jax.block_until_ready(out)

    # Pure-JAX reference of the same forward pass.
    ref = jax.nn.sigmoid(x @ w1 + b1) @ w2 + b2
    assert out.shape == (B, n_output)
    assert jnp.allclose(out, ref, atol=1e-5, rtol=1e-4)

    print("KERNEL_OK")
</pallas_src>

<mosaic_0001>
module attributes {stable_mosaic.version = 11 : i64} {
  func.func @net1_kernel(%arg0: i32, %arg1: memref<8x16xf32, #tpu.memory_space<vmem>>, %arg2: memref<16x32xf32, #tpu.memory_space<vmem>>, %arg3: memref<1x32xf32, #tpu.memory_space<vmem>>, %arg4: memref<32x128xf32, #tpu.memory_space<vmem>>, %arg5: memref<1x128xf32, #tpu.memory_space<vmem>>, %arg6: memref<8x128xf32, #tpu.memory_space<vmem>>) attributes {dimension_semantics = [#tpu.dimension_semantics<parallel>], iteration_bounds = array<i64: 1>, scalar_prefetch = 0 : i64, scratch_operands = 0 : i64, tpu.core_type = #tpu.core_type<tc>, window_params = [{transform_indices = @transform_0, window_bounds = array<i64: 8, 16>}, {pipeline_mode = #tpu.pipeline_mode<synchronous>, transform_indices = @transform_1, window_bounds = array<i64: 16, 32>}, {pipeline_mode = #tpu.pipeline_mode<synchronous>, transform_indices = @transform_2, window_bounds = array<i64: 1, 32>}, {pipeline_mode = #tpu.pipeline_mode<synchronous>, transform_indices = @transform_3, window_bounds = array<i64: 32, 128>}, {pipeline_mode = #tpu.pipeline_mode<synchronous>, transform_indices = @transform_4, window_bounds = array<i64: 1, 128>}, {transform_indices = @transform_5, window_bounds = array<i64: 8, 128>}]} {
    %c0 = arith.constant 0 : index
    %c0_0 = arith.constant 0 : index
    %0 = vector.load %arg1[%c0, %c0_0] : memref<8x16xf32, #tpu.memory_space<vmem>>, vector<8x16xf32>
    %c0_1 = arith.constant 0 : index
    %c0_2 = arith.constant 0 : index
    %1 = vector.load %arg2[%c0_1, %c0_2] : memref<16x32xf32, #tpu.memory_space<vmem>>, vector<16x32xf32>
    %cst = arith.constant dense<0.000000e+00> : vector<8x32xf32>
    %2 = tpu.matmul %0, %1, %cst {dimension_numbers = #tpu.dot_dimension_numbers<[1], [0], [0], [1], [0, 0, 1, 1], [], []>} : vector<8x16xf32>, vector<16x32xf32>, vector<8x32xf32> -> vector<8x32xf32>
    %c0_3 = arith.constant 0 : index
    %c0_4 = arith.constant 0 : index
    %3 = vector.load %arg3[%c0_3, %c0_4] : memref<1x32xf32, #tpu.memory_space<vmem>>, vector<1x32xf32>
    %4 = vector.broadcast %3 : vector<1x32xf32> to vector<8x32xf32>
    %5 = arith.addf %2, %4 : vector<8x32xf32>
    %6 = arith.negf %5 : vector<8x32xf32>
    %7 = math.exp %6 : vector<8x32xf32>
    %cst_5 = arith.constant 1.000000e+00 : f32
    %8 = vector.broadcast %cst_5 : f32 to vector<8x32xf32>
    %9 = arith.addf %8, %7 : vector<8x32xf32>
    %10 = arith.divf %8, %9 : vector<8x32xf32>
    %c0_6 = arith.constant 0 : index
    %c0_7 = arith.constant 0 : index
    %11 = vector.load %arg4[%c0_6, %c0_7] : memref<32x128xf32, #tpu.memory_space<vmem>>, vector<32x128xf32>
    %cst_8 = arith.constant dense<0.000000e+00> : vector<8x128xf32>
    %12 = tpu.matmul %10, %11, %cst_8 {dimension_numbers = #tpu.dot_dimension_numbers<[1], [0], [0], [1], [0, 0, 1, 1], [], []>} : vector<8x32xf32>, vector<32x128xf32>, vector<8x128xf32> -> vector<8x128xf32>
    %c0_9 = arith.constant 0 : index
    %c0_10 = arith.constant 0 : index
    %13 = vector.load %arg5[%c0_9, %c0_10] : memref<1x128xf32, #tpu.memory_space<vmem>>, vector<1x128xf32>
    %14 = vector.broadcast %13 : vector<1x128xf32> to vector<8x128xf32>
    %15 = arith.addf %12, %14 : vector<8x128xf32>
    %c0_11 = arith.constant 0 : index
    %c0_12 = arith.constant 0 : index
    %16 = vector.load %arg6[%c0_11, %c0_12] : memref<8x128xf32, #tpu.memory_space<vmem>>, vector<8x128xf32>
    tpu.vector_store %arg6[%c0_11, %c0_12], %15 {strides = array<i32>} : memref<8x128xf32, #tpu.memory_space<vmem>>, vector<8x128xf32>,
    return
  }
  func.func @transform_0(%arg0: i32) -> (i32, i32) {
    %c0_i32 = arith.constant 0 : i32
    %c0_i32_0 = arith.constant 0 : i32
    return %arg0, %c0_i32 : i32, i32
  }
  func.func @transform_1(%arg0: i32) -> (i32, i32) {
    %c0_i32 = arith.constant 0 : i32
    %c0_i32_0 = arith.constant 0 : i32
    %c0_i32_1 = arith.constant 0 : i32
    return %c0_i32, %c0_i32_0 : i32, i32
  }
  func.func @transform_2(%arg0: i32) -> (i32, i32) {
    %c0_i32 = arith.constant 0 : i32
    %c0_i32_0 = arith.constant 0 : i32
    %c0_i32_1 = arith.constant 0 : i32
    return %c0_i32, %c0_i32_0 : i32, i32
  }
  func.func @transform_3(%arg0: i32) -> (i32, i32) {
    %c0_i32 = arith.constant 0 : i32
    %c0_i32_0 = arith.constant 0 : i32
    %c0_i32_1 = arith.constant 0 : i32
    return %c0_i32, %c0_i32_0 : i32, i32
  }
  func.func @transform_4(%arg0: i32) -> (i32, i32) {
    %c0_i32 = arith.constant 0 : i32
    %c0_i32_0 = arith.constant 0 : i32
    %c0_i32_1 = arith.constant 0 : i32
    return %c0_i32, %c0_i32_0 : i32, i32
  }
  func.func @transform_5(%arg0: i32) -> (i32, i32) {
    %c0_i32 = arith.constant 0 : i32
    %c0_i32_0 = arith.constant 0 : i32
    return %arg0, %c0_i32 : i32, i32
  }
}

</mosaic_0001>

<llo_original>
// kernel: tpu_custom_call.1
$region0: #{tpu_custom_call.1}
  #allocation0 [shape = 'u32[]', space=smem, size = 0x4, offset = 0x4, fixed_abs, tag = 'smem constant byte address 0x4 - core index']
  #allocation1 [shape = 'u32[72,128]{1,0:T(1,128)}', space=vmem, size = 0x9000, scoped, tag = 'internal scratch']
  %s0 = inlined_call_operand.hbm [shape: f32[8,16], index: 0, kind: input, shape index: {}]
  %s1 = inlined_call_operand.hbm [shape: f32[16,32], index: 1, kind: input, shape index: {}]
  %s2 = inlined_call_operand.vmem [shape: f32[1,32], index: 2, kind: input, shape index: {}]
  %s3 = inlined_call_operand.hbm [shape: f32[32,128], index: 3, kind: input, shape index: {}]
  %s4 = inlined_call_operand.vmem [shape: f32[1,128], index: 4, kind: input, shape index: {}]
  %s5 = inlined_call_operand.hbm [shape: f32[8,128], index: 5, kind: output, shape index: {}]
  %s6 = sld [smem:[#allocation0]]
  $region42: #{tpu_custom_call.1} parent=0
    _
  %s8 = ssub.s32 1, %s6
  %s9 = scalar_select 0, %s8, %s6
  $region1: #{tpu_custom_call.1} parent=0
    #allocation2 [shape = 'u8[4096]{0}', space=vmem, size = 0x1000, scoped, tag = 'input window, operand 0, single buffered']
    #allocation3 [shape = 's32[1]{0}', space=sflag, size = 0x4, scoped, tag = 'scoped memory for tpu_custom_call.1']
    #allocation4 [shape = 's32[1]{0}', space=sflag, size = 0x4, scoped, tag = 'scoped memory for tpu_custom_call.1']
    #allocation5 [shape = 'u8[8192]{0}', space=vmem, size = 0x2000, scoped, tag = 'input window, operand 1, single buffered']
    #allocation6 [shape = 's32[1]{0}', space=sflag, size = 0x4, scoped, tag = 'scoped memory for tpu_custom_call.1']
    #allocation7 [shape = 'u8[16384]{0}', space=vmem, size = 0x4000, scoped, tag = 'input window, operand 3, single buffered']
    #allocation8 [shape = 'u8[4096]{0}', space=vmem, size = 0x1000, scoped, tag = 'output window, operand 0, single buffered']
    %10 = vsyncpa [#allocation3], 0
    %11 = vsyncpa [#allocation6], 0
    %12 = vsyncpa [#allocation4], 0
    // Predicated region
    $region2: #{tpu_custom_call.1} parent=1 // pred_check
      _
    $region3: #{tpu_custom_call.1} parent=1 // pred_check_branch
      %14 = sbr.rel (0) target = $region5
    $region4: #{tpu_custom_call.1} parent=1 // pred_region
      %16 = vsyncadd [#allocation3], 0
      %s18 = sshll.u32 %s0, 4
      %s19 = int_to_ptr.hbm [resolvable:$true] %s18
      %s20 = sshll.u32 [#allocation2], 4
      %s21 = int_to_ptr.vmem [resolvable:$true] %s20
      %23 = dma.hbm_to_vmem [thread:$0]  %s19, 128, %s21, [#allocation3]
    $region5: #{tpu_custom_call.1} parent=1 // pred_fallthru
      _
    // Predicated region
    $region6: #{tpu_custom_call.1} parent=1 // pred_check
      _
    $region7: #{tpu_custom_call.1} parent=1 // pred_check_branch
      %25 = sbr.rel (0) target = $region9
    $region8: #{tpu_custom_call.1} parent=1 // pred_region
      %27 = vsyncadd [#allocation6], 0
      %s28 = sshll.u32 %s1, 4
      %s29 = int_to_ptr.hbm [resolvable:$true] %s28
      %s30 = sshll.u32 [#allocation5], 4
      %s31 = int_to_ptr.vmem [resolvable:$true] %s30
      %36 = dma.hbm_to_vmem [thread:$0]  %s29, 256, %s31, [#allocation6], 128, 128, 8
    $region9: #{tpu_custom_call.1} parent=1 // pred_fallthru
      _
    // Predicated region
    $region10: #{tpu_custom_call.1} parent=1 // pred_check
      _
    $region11: #{tpu_custom_call.1} parent=1 // pred_check_branch
      %38 = sbr.rel (0) target = $region13
    $region12: #{tpu_custom_call.1} parent=1 // pred_region
      _
    $region13: #{tpu_custom_call.1} parent=1 // pred_fallthru
      _
    // Predicated region
    $region14: #{tpu_custom_call.1} parent=1 // pred_check
      _
    $region15: #{tpu_custom_call.1} parent=1 // pred_check_branch
      %40 = sbr.rel (0) target = $region17
    $region16: #{tpu_custom_call.1} parent=1 // pred_region
      %42 = vsyncadd [#allocation6], 0
      %s43 = sshll.u32 %s3, 4
      %s44 = int_to_ptr.hbm [resolvable:$true] %s43
      %s45 = sshll.u32 [#allocation7], 4
      %s46 = int_to_ptr.vmem [resolvable:$true] %s45
      %51 = dma.hbm_to_vmem [thread:$0]  %s44, 512, %s46, [#allocation6], 128, 128, 8
    $region17: #{tpu_custom_call.1} parent=1 // pred_fallthru
      _
    // Predicated region
    $region18: #{tpu_custom_call.1} parent=1 // pred_check
      _
    $region19: #{tpu_custom_call.1} parent=1 // pred_check_branch
      %53 = sbr.rel (0) target = $region21
    $region20: #{tpu_custom_call.1} parent=1 // pred_region
      _
    $region21: #{tpu_custom_call.1} parent=1 // pred_fallthru
      _
    // Predicated region
    $region22: #{tpu_custom_call.1} parent=1 // pred_check
      _
    $region23: #{tpu_custom_call.1} parent=1 // pred_check_branch
      %55 = sbr.rel (0) target = $region25
    $region24: #{tpu_custom_call.1} parent=1 // pred_region
      %57 = dma.done [#allocation3], 128
    $region25: #{tpu_custom_call.1} parent=1 // pred_fallthru
      _
    // Predicated region
    $region26: #{tpu_custom_call.1} parent=1 // pred_check
      _
    $region27: #{tpu_custom_call.1} parent=1 // pred_check_branch
      %59 = sbr.rel (0) target = $region29
    $region28: #{tpu_custom_call.1} parent=1 // pred_region
      %61 = dma.done [#allocation6], 256
    $region29: #{tpu_custom_call.1} parent=1 // pred_fallthru
      _
    // Predicated region
    $region30: #{tpu_custom_call.1} parent=1 // pred_check
      _
    $region31: #{tpu_custom_call.1} parent=1 // pred_check_branch
      %63 = sbr.rel (0) target = $region33
    $region32: #{tpu_custom_call.1} parent=1 // pred_region
      %65 = dma.done [#allocation6], 512
    $region33: #{tpu_custom_call.1} parent=1 // pred_fallthru
      _
    %v66 = vld [vmem:[#allocation2] sm:$0xff]
    %v67 = vld [vmem:[#allocation5] sm:$0xff]
    %v68 = vld [vmem:[#allocation5 + $0x8] sm:$0xff]
    %v69 = vld [vmem:[%s2] sm:$0x1]
    %v71 = vperm.slane %v69, 0
    %vm73 = vcmask 130048
    %v75 = vsel %vm73, %v66, 0
    %77 = vmatpush.msra.mxu0 0.0
    %78 = vmatpush.msra.mxu0 0.0
    %79 = vmatpush.msra.mxu0 0.0
    %80 = vmatpush.msra.mxu0 0.0
    %81 = vmatpush.msra.mxu0 0.0
    %82 = vmatpush.msra.mxu0 0.0
    %83 = vmatpush.msra.mxu0 0.0
    %84 = vmatpush.msra.mxu0 0.0
    %85 = vmatpush.msra.mxu0 0.0
    %86 = vmatpush.msra.mxu0 0.0
    %87 = vmatpush.msra.mxu0 0.0
    %88 = vmatpush.msra.mxu0 0.0
    %89 = vmatpush.msra.mxu0 0.0
    %90 = vmatpush.msra.mxu0 0.0
    %91 = vmatpush.msra.mxu0 %v68
    %92 = vmatpush.msra.mxu0 %v67
    %93 = vmatmul.f32.gmra.mxu0 %v75
    %v94 = vpop.f32.mrf.mxu0
    %v95 = vadd.f32 %v71, %v94
    %96 = vdwg.mxu0
    %v97 = vxor.u32 %v95, 2147483648
    %v98 = vmul.f32 %v97, 1.442695
    %v99 = vpow.pop %v98
    %v100 = vadd.f32 %v99, 1.0
    %v101 = vrcp.pop %v100
    %v102 = vmul.f32 %v100, %v101
    %v103 = vsub.f32 1.0, %v102
    %v104 = vmul.f32 %v101, %v103
    %v105 = vadd.f32 %v101, %v104
    %vm106 = vweird.f32 %v100
    %vm107 = vweird.f32 %v101
    %vm108 = vmor %vm106, %vm107
    %v109 = vsel %vm108, %v101, %v105
    %v110 = vand.u32 2147483647, %v100
    %vm111 = vcmp.eq.f32.partialorder %v110, 8.507059e+37
    %v112 = vand.u32 %v100, 2147483648
    %v113 = vor.u32 1.1754944e-38, %v112
    %v114 = vsel %vm111, %v113, %v109
    %v115 = vmul.f32 1.0, %v114
    %v116 = vld [vmem:[#allocation7] sm:$0xff]
    %v117 = vld [vmem:[#allocation7 + $0x8] sm:$0xff]
    %v118 = vld [vmem:[#allocation7 + $0x10] sm:$0xff]
    %v119 = vld [vmem:[#allocation7 + $0x18] sm:$0xff]
    %v120 = vld [vmem:[%s4] sm:$0x1]
    %v122 = vperm.slane %v120, 0
    %vm124 = vcmask 261120
    %v126 = vsel %vm124, %v115, 0
    %128 = vmatpush.msra.mxu0 0.0
    %129 = vmatpush.msra.mxu0 0.0
    %130 = vmatpush.msra.mxu0 0.0
    %131 = vmatpush.msra.mxu0 0.0
    %132 = vmatpush.msra.mxu0 0.0
    %133 = vmatpush.msra.mxu0 0.0
    %134 = vmatpush.msra.mxu0 0.0
    %135 = vmatpush.msra.mxu0 0.0
    %136 = vmatpush.msra.mxu0 0.0
    %137 = vmatpush.msra.mxu0 0.0
    %138 = vmatpush.msra.mxu0 0.0
    %139 = vmatpush.msra.mxu0 0.0
    %140 = vmatpush.msra.mxu0 %v119
    %141 = vmatpush.msra.mxu0 %v118
    %142 = vmatpush.msra.mxu0 %v117
    %143 = vmatpush.msra.mxu0 %v116
    %144 = vmatmul.f32.gmra.mxu0 %v126
    %v145 = vpop.f32.mrf.mxu0
    %v146 = vadd.f32 %v122, %v145
    %147 = vdwg.mxu0
    %148 = vst [vmem:[#allocation8] sm:$0xff] %v146
    // Predicated region
    $region34: #{tpu_custom_call.1} parent=1 // pred_check
      _
    $region35: #{tpu_custom_call.1} parent=1 // pred_check_branch
      %150 = sbr.rel (0) target = $region37
    $region36: #{tpu_custom_call.1} parent=1 // pred_region
      %152 = vsyncadd [#allocation4], 0
      %s154 = sshll.u32 [#allocation8], 4
      %s155 = int_to_ptr.vmem [resolvable:$true] %s154
      %s156 = sshll.u32 %s5, 4
      %s157 = int_to_ptr.hbm [resolvable:$true] %s156
      %159 = dma.vmem_to_hbm [thread:$0]  %s155, 128, %s157, [#allocation4]
    $region37: #{tpu_custom_call.1} parent=1 // pred_fallthru
      _
    // Predicated region
    $region38: #{tpu_custom_call.1} parent=1 // pred_check
      _
    $region39: #{tpu_custom_call.1} parent=1 // pred_check_branch
      %161 = sbr.rel (0) target = $region41
    $region40: #{tpu_custom_call.1} parent=1 // pred_region
      %163 = dma.done [#allocation4], 128
    $region41: #{tpu_custom_call.1} parent=1 // pred_fallthru
      _
    %164 = vsyncpa [#allocation3], 1
    %165 = vsyncpa [#allocation6], 1
    %166 = vsyncpa [#allocation4], 1

</llo_original>
